<compile_context>
chip_gen: v5e
topology: v5e:2x2
jax: 0.10.0
libtpu: 0.0.40
codegen_flags: <defaults>
</compile_context>

<pallas_src>
import jax
import jax.numpy as jnp
from jax.experimental import pallas as pl
from jax.experimental.pallas import tpu as pltpu

LANE = 128  # TPU lane width — pad the hidden/output feature dim to this.


def rnn_cell_kernel(x_ref, h_ref, wx_ref, wh_ref, b_ref, out_ref):
    # Two accumulating MXU dots (concat folded into the kernel), f32 epilogue.
    acc = jnp.dot(x_ref[...], wx_ref[...], preferred_element_type=jnp.float32)
    acc = acc + jnp.dot(h_ref[...], wh_ref[...], preferred_element_type=jnp.float32)
    out_ref[...] = jnp.tanh(acc + b_ref[...]).astype(out_ref.dtype)


def prepare_params(w_ih, w_hh, b_ih, b_hh):
    """One-time parameter prep (hoisted out of the forward path).

    PyTorch RNNCell conventions in:
      w_ih: (H, I), w_hh: (H, H), b_ih/b_hh: (H,)
    Returns MXU-ready, lane-dense-padded params:
      wx_pad: (I, Hpad) = W_ih^T zero-padded in N
      wh_pad: (H, Hpad) = W_hh^T zero-padded in N
      b_pad : (1, Hpad) = (b_ih + b_hh) zero-padded
    """
    hidden, input_size = w_ih.shape
    hpad = pl.cdiv(hidden, LANE) * LANE
    wx_pad = jnp.zeros((input_size, hpad), w_ih.dtype).at[:, :hidden].set(w_ih.T)
    wh_pad = jnp.zeros((hidden, hpad), w_hh.dtype).at[:, :hidden].set(w_hh.T)
    b_pad = jnp.zeros((1, hpad), b_ih.dtype).at[0, :hidden].set(b_ih + b_hh)
    return wx_pad, wh_pad, b_pad


@jax.jit
def rnn_cell_forward(x, h, wx_pad, wh_pad, b_pad):
    """Jitted Pallas forward. Params come from prepare_params (called once)."""
    batch = x.shape[0]
    hidden = h.shape[1]
    hpad = wx_pad.shape[1]

    # Toy sizes: everything fits VMEM as single full-array blocks (grid=()).
    full = lambda a: pl.BlockSpec(a.shape, lambda: (0,) * a.ndim)

    out_pad = pl.pallas_call(
        rnn_cell_kernel,
        out_shape=jax.ShapeDtypeStruct((batch, hpad), x.dtype),
        grid_spec=pltpu.PrefetchScalarGridSpec(
            num_scalar_prefetch=0,
            grid=(),
            in_specs=[full(x), full(h), full(wx_pad), full(wh_pad), full(b_pad)],
            out_specs=pl.BlockSpec((batch, hpad), lambda: (0, 0)),
        ),
    )(x, h, wx_pad, wh_pad, b_pad)

    # Lane-dense kernel output; slice back to the logical hidden size here
    # (fuses with the output readback under jit).
    return out_pad[:, :hidden]


def reference_rnn_cell(x, h, w_ih, w_hh, b_ih, b_hh):
    return jnp.tanh(x @ w_ih.T + b_ih + h @ w_hh.T + b_hh)


if __name__ == "__main__":
    batch_size = 1
    hidden_size = 4
    input_size = 4

    key = jax.random.PRNGKey(0)
    k_x, k_h, k_wih, k_whh, k_bih, k_bhh = jax.random.split(key, 6)

    # Deterministic init mimicking torch.nn.RNNCell: U(-1/sqrt(H), 1/sqrt(H)).
    bound = 1.0 / jnp.sqrt(jnp.float32(hidden_size))
    w_ih = jax.random.uniform(k_wih, (hidden_size, input_size), jnp.float32, -bound, bound)
    w_hh = jax.random.uniform(k_whh, (hidden_size, hidden_size), jnp.float32, -bound, bound)
    b_ih = jax.random.uniform(k_bih, (hidden_size,), jnp.float32, -bound, bound)
    b_hh = jax.random.uniform(k_bhh, (hidden_size,), jnp.float32, -bound, bound)

    x = jax.random.normal(k_x, (batch_size, input_size), jnp.float32)
    h0 = jnp.zeros((batch_size, hidden_size), jnp.float32)  # Model.init_hidden()

    # One-time param prep (transpose + N-pad + bias fuse), outside the step path.
    wx_pad, wh_pad, b_pad = prepare_params(w_ih, w_hh, b_ih, b_hh)

    h_new = rnn_cell_forward(x, h0, wx_pad, wh_pad, b_pad)
    h_new = jax.block_until_ready(h_new)

    ref = reference_rnn_cell(x, h0, w_ih, w_hh, b_ih, b_hh)
    assert h_new.shape == (batch_size, hidden_size)
    assert jnp.allclose(h_new, ref, atol=1e-5, rtol=1e-5)

    print("KERNEL_OK")
</pallas_src>

<mosaic_0001>
module attributes {stable_mosaic.version = 11 : i64} {
  func.func @rnn_cell_kernel(%arg0: memref<1x4xf32, #tpu.memory_space<vmem>>, %arg1: memref<1x4xf32, #tpu.memory_space<vmem>>, %arg2: memref<4x128xf32, #tpu.memory_space<vmem>>, %arg3: memref<4x128xf32, #tpu.memory_space<vmem>>, %arg4: memref<1x128xf32, #tpu.memory_space<vmem>>, %arg5: memref<1x128xf32, #tpu.memory_space<vmem>>) attributes {dimension_semantics = [], scalar_prefetch = 0 : i64, scratch_operands = 0 : i64, tpu.core_type = #tpu.core_type<tc>} {
    %c0 = arith.constant 0 : index
    %c0_0 = arith.constant 0 : index
    %0 = vector.load %arg0[%c0, %c0_0] : memref<1x4xf32, #tpu.memory_space<vmem>>, vector<1x4xf32>
    %c0_1 = arith.constant 0 : index
    %c0_2 = arith.constant 0 : index
    %1 = vector.load %arg2[%c0_1, %c0_2] : memref<4x128xf32, #tpu.memory_space<vmem>>, vector<4x128xf32>
    %cst = arith.constant dense<0.000000e+00> : vector<1x128xf32>
    %2 = tpu.matmul %0, %1, %cst {dimension_numbers = #tpu.dot_dimension_numbers<[1], [0], [0], [1], [0, 0, 1, 1], [], []>} : vector<1x4xf32>, vector<4x128xf32>, vector<1x128xf32> -> vector<1x128xf32>
    %c0_3 = arith.constant 0 : index
    %c0_4 = arith.constant 0 : index
    %3 = vector.load %arg1[%c0_3, %c0_4] : memref<1x4xf32, #tpu.memory_space<vmem>>, vector<1x4xf32>
    %c0_5 = arith.constant 0 : index
    %c0_6 = arith.constant 0 : index
    %4 = vector.load %arg3[%c0_5, %c0_6] : memref<4x128xf32, #tpu.memory_space<vmem>>, vector<4x128xf32>
    %cst_7 = arith.constant dense<0.000000e+00> : vector<1x128xf32>
    %5 = tpu.matmul %3, %4, %cst_7 {dimension_numbers = #tpu.dot_dimension_numbers<[1], [0], [0], [1], [0, 0, 1, 1], [], []>} : vector<1x4xf32>, vector<4x128xf32>, vector<1x128xf32> -> vector<1x128xf32>
    %6 = arith.addf %2, %5 : vector<1x128xf32>
    %c0_8 = arith.constant 0 : index
    %c0_9 = arith.constant 0 : index
    %7 = vector.load %arg4[%c0_8, %c0_9] : memref<1x128xf32, #tpu.memory_space<vmem>>, vector<1x128xf32>
    %8 = arith.addf %6, %7 : vector<1x128xf32>
    %9 = math.tanh %8 : vector<1x128xf32>
    %c0_10 = arith.constant 0 : index
    %c0_11 = arith.constant 0 : index
    %10 = vector.load %arg5[%c0_10, %c0_11] : memref<1x128xf32, #tpu.memory_space<vmem>>, vector<1x128xf32>
    tpu.vector_store %arg5[%c0_10, %c0_11], %9 {strides = array<i32>} : memref<1x128xf32, #tpu.memory_space<vmem>>, vector<1x128xf32>,
    return
  }
}

</mosaic_0001>

<llo_original>
// kernel: rnn_cell_forward.1
$region0: #{rnn_cell_forward.1}
  #allocation0 [shape = 'u32[]', space=smem, size = 0x4, offset = 0x4, fixed_abs, tag = 'smem constant byte address 0x4 - core index']
  #allocation1 [shape = 'u32[72,128]{1,0:T(1,128)}', space=vmem, size = 0x9000, scoped, tag = 'internal scratch']
  %s0 = inlined_call_operand.hbm [shape: f32[1,4], index: 0, kind: input, shape index: {}]
  %s1 = inlined_call_operand.hbm [shape: f32[1,4], index: 1, kind: input, shape index: {}]
  %s2 = inlined_call_operand.hbm [shape: f32[4,128], index: 2, kind: input, shape index: {}]
  %s3 = inlined_call_operand.hbm [shape: f32[4,128], index: 3, kind: input, shape index: {}]
  %s4 = inlined_call_operand.vmem [shape: f32[1,128], index: 4, kind: input, shape index: {}]
  %s5 = inlined_call_operand.hbm [shape: f32[1,128], index: 5, kind: output, shape index: {}]
  %s6 = sld [smem:[#allocation0]]
  $region46: #{rnn_cell_forward.1} parent=0
    _
  %s8 = ssub.s32 1, %s6
  %s9 = scalar_select 0, %s8, %s6
  $region1: #{rnn_cell_forward.1} parent=0
    #allocation2 [shape = 'u8[512]{0}', space=vmem, size = 0x400, scoped, tag = 'input window, operand 0, single buffered']
    #allocation3 [shape = 's32[1]{0}', space=sflag, size = 0x4, scoped, tag = 'scoped memory for rnn_cell_forward.1']
    #allocation4 [shape = 's32[1]{0}', space=sflag, size = 0x4, scoped, tag = 'scoped memory for rnn_cell_forward.1']
    #allocation5 [shape = 'u8[512]{0}', space=vmem, size = 0x400, scoped, tag = 'input window, operand 1, single buffered']
    #allocation6 [shape = 's32[1]{0}', space=sflag, size = 0x4, scoped, tag = 'scoped memory for rnn_cell_forward.1']
    #allocation7 [shape = 'u8[2048]{0}', space=vmem, size = 0x800, scoped, tag = 'input window, operand 2, single buffered']
    #allocation8 [shape = 'u8[2048]{0}', space=vmem, size = 0x800, scoped, tag = 'input window, operand 3, single buffered']
    #allocation9 [shape = 's32[1]{0}', space=sflag, size = 0x4, scoped, tag = 'scoped memory for rnn_cell_forward.1']
    #allocation10 [shape = 'u8[512]{0}', space=vmem, size = 0x400, scoped, tag = 'output window, operand 0, single buffered']
    %10 = vsyncpa [#allocation3], 0
    %11 = vsyncpa [#allocation6], 0
    %12 = vsyncpa [#allocation9], 0
    %13 = vsyncpa [#allocation4], 0
    // Predicated region
    $region2: #{rnn_cell_forward.1} parent=1 // pred_check
      _
    $region3: #{rnn_cell_forward.1} parent=1 // pred_check_branch
      %15 = sbr.rel (0) target = $region5
    $region4: #{rnn_cell_forward.1} parent=1 // pred_region
      %17 = vsyncadd [#allocation3], 0
      %s19 = sshll.u32 %s0, 4
      %s20 = int_to_ptr.hbm [resolvable:$true] %s19
      %s21 = sshll.u32 [#allocation2], 4
      %s22 = int_to_ptr.vmem [resolvable:$true] %s21
      %24 = dma.hbm_to_vmem [thread:$0]  %s20, 16, %s22, [#allocation3]
    $region5: #{rnn_cell_forward.1} parent=1 // pred_fallthru
      _
    // Predicated region
    $region6: #{rnn_cell_forward.1} parent=1 // pred_check
      _
    $region7: #{rnn_cell_forward.1} parent=1 // pred_check_branch
      %26 = sbr.rel (0) target = $region9
    $region8: #{rnn_cell_forward.1} parent=1 // pred_region
      %28 = vsyncadd [#allocation6], 0
      %s30 = sshll.u32 %s1, 4
      %s31 = int_to_ptr.hbm [resolvable:$true] %s30
      %s32 = sshll.u32 [#allocation5], 4
      %s33 = int_to_ptr.vmem [resolvable:$true] %s32
      %35 = dma.hbm_to_vmem [thread:$0]  %s31, 16, %s33, [#allocation6]
    $region9: #{rnn_cell_forward.1} parent=1 // pred_fallthru
      _
    // Predicated region
    $region10: #{rnn_cell_forward.1} parent=1 // pred_check
      _
    $region11: #{rnn_cell_forward.1} parent=1 // pred_check_branch
      %37 = sbr.rel (0) target = $region13
    $region12: #{rnn_cell_forward.1} parent=1 // pred_region
      %39 = vsyncadd [#allocation6], 0
      %s41 = sshll.u32 %s2, 4
      %s42 = int_to_ptr.hbm [resolvable:$true] %s41
      %s43 = sshll.u32 [#allocation7], 4
      %s44 = int_to_ptr.vmem [resolvable:$true] %s43
      %46 = dma.hbm_to_vmem [thread:$0]  %s42, 64, %s44, [#allocation6]
    $region13: #{rnn_cell_forward.1} parent=1 // pred_fallthru
      _
    // Predicated region
    $region14: #{rnn_cell_forward.1} parent=1 // pred_check
      _
    $region15: #{rnn_cell_forward.1} parent=1 // pred_check_branch
      %48 = sbr.rel (0) target = $region17
    $region16: #{rnn_cell_forward.1} parent=1 // pred_region
      %50 = vsyncadd [#allocation9], 0
      %s52 = sshll.u32 %s3, 4
      %s53 = int_to_ptr.hbm [resolvable:$true] %s52
      %s54 = sshll.u32 [#allocation8], 4
      %s55 = int_to_ptr.vmem [resolvable:$true] %s54
      %57 = dma.hbm_to_vmem [thread:$0]  %s53, 64, %s55, [#allocation9]
    $region17: #{rnn_cell_forward.1} parent=1 // pred_fallthru
      _
    // Predicated region
    $region18: #{rnn_cell_forward.1} parent=1 // pred_check
      _
    $region19: #{rnn_cell_forward.1} parent=1 // pred_check_branch
      %59 = sbr.rel (0) target = $region21
    $region20: #{rnn_cell_forward.1} parent=1 // pred_region
      _
    $region21: #{rnn_cell_forward.1} parent=1 // pred_fallthru
      _
    // Predicated region
    $region22: #{rnn_cell_forward.1} parent=1 // pred_check
      _
    $region23: #{rnn_cell_forward.1} parent=1 // pred_check_branch
      %61 = sbr.rel (0) target = $region25
    $region24: #{rnn_cell_forward.1} parent=1 // pred_region
      %63 = dma.done [#allocation3], 16
    $region25: #{rnn_cell_forward.1} parent=1 // pred_fallthru
      _
    // Predicated region
    $region26: #{rnn_cell_forward.1} parent=1 // pred_check
      _
    $region27: #{rnn_cell_forward.1} parent=1 // pred_check_branch
      %65 = sbr.rel (0) target = $region29
    $region28: #{rnn_cell_forward.1} parent=1 // pred_region
      %67 = dma.done [#allocation6], 16
    $region29: #{rnn_cell_forward.1} parent=1 // pred_fallthru
      _
    // Predicated region
    $region30: #{rnn_cell_forward.1} parent=1 // pred_check
      _
    $region31: #{rnn_cell_forward.1} parent=1 // pred_check_branch
      %69 = sbr.rel (0) target = $region33
    $region32: #{rnn_cell_forward.1} parent=1 // pred_region
      %71 = dma.done [#allocation6], 64
    $region33: #{rnn_cell_forward.1} parent=1 // pred_fallthru
      _
    // Predicated region
    $region34: #{rnn_cell_forward.1} parent=1 // pred_check
      _
    $region35: #{rnn_cell_forward.1} parent=1 // pred_check_branch
      %73 = sbr.rel (0) target = $region37
    $region36: #{rnn_cell_forward.1} parent=1 // pred_region
      %75 = dma.done [#allocation9], 64
    $region37: #{rnn_cell_forward.1} parent=1 // pred_fallthru
      _
    %v76 = vld [vmem:[#allocation2] sm:$0x1]
    %v77 = vld [vmem:[#allocation7] sm:$0xf]
    %v78 = vld [vmem:[#allocation5] sm:$0x1]
    %v79 = vld [vmem:[#allocation8] sm:$0xf]
    %vm80 = vcmask 31744
    %v82 = vsel %vm80, %v78, 0
    %vm84 = vcmask 1043456
    %v86 = vsel %vm84, %v79, 0
    %88 = vmatpush.msra.mxu0 0.0
    %89 = vmatpush.msra.mxu0 0.0
    %90 = vmatpush.msra.mxu0 0.0
    %91 = vmatpush.msra.mxu0 0.0
    %92 = vmatpush.msra.mxu0 0.0
    %93 = vmatpush.msra.mxu0 0.0
    %94 = vmatpush.msra.mxu0 0.0
    %95 = vmatpush.msra.mxu0 0.0
    %96 = vmatpush.msra.mxu0 0.0
    %97 = vmatpush.msra.mxu0 0.0
    %98 = vmatpush.msra.mxu0 0.0
    %99 = vmatpush.msra.mxu0 0.0
    %100 = vmatpush.msra.mxu0 0.0
    %101 = vmatpush.msra.mxu0 0.0
    %102 = vmatpush.msra.mxu0 0.0
    %103 = vmatpush.msra.mxu0 %v86
    %104 = vmatmul.f32.gmra.mxu0 %v82
    %v105 = vpop.f32.mrf.mxu0
    %v106 = vadd.f32 0.0, %v105
    %107 = vdwg.mxu0
    %v109 = vsel %vm80, %v76, 0
    %v112 = vsel %vm84, %v77, 0
    %114 = vmatpush.msra.mxu0 0.0
    %115 = vmatpush.msra.mxu0 0.0
    %116 = vmatpush.msra.mxu0 0.0
    %117 = vmatpush.msra.mxu0 0.0
    %118 = vmatpush.msra.mxu0 0.0
    %119 = vmatpush.msra.mxu0 0.0
    %120 = vmatpush.msra.mxu0 0.0
    %121 = vmatpush.msra.mxu0 0.0
    %122 = vmatpush.msra.mxu0 0.0
    %123 = vmatpush.msra.mxu0 0.0
    %124 = vmatpush.msra.mxu0 0.0
    %125 = vmatpush.msra.mxu0 0.0
    %126 = vmatpush.msra.mxu0 0.0
    %127 = vmatpush.msra.mxu0 0.0
    %128 = vmatpush.msra.mxu0 0.0
    %129 = vmatpush.msra.mxu0 %v112
    %130 = vmatmul.f32.gmra.mxu0 %v109
    %v131 = vpop.f32.mrf.mxu0
    %v132 = vadd.f32 %v106, %v131
    %133 = vdwg.mxu0
    %v134 = vld [vmem:[%s4] sm:$0x1]
    %v135 = vadd.f32 %v132, %v134
    %v136 = vtanh.pop %v135
    %137 = vst [vmem:[#allocation10] sm:$0x1] %v136
    // Predicated region
    $region38: #{rnn_cell_forward.1} parent=1 // pred_check
      _
    $region39: #{rnn_cell_forward.1} parent=1 // pred_check_branch
      %139 = sbr.rel (0) target = $region41
    $region40: #{rnn_cell_forward.1} parent=1 // pred_region
      %141 = vsyncadd [#allocation4], 0
      %s143 = sshll.u32 [#allocation10], 4
      %s144 = int_to_ptr.vmem [resolvable:$true] %s143
      %s145 = sshll.u32 %s5, 4
      %s146 = int_to_ptr.hbm [resolvable:$true] %s145
      %148 = dma.vmem_to_hbm [thread:$0]  %s144, 16, %s146, [#allocation4]
    $region41: #{rnn_cell_forward.1} parent=1 // pred_fallthru
      _
    // Predicated region
    $region42: #{rnn_cell_forward.1} parent=1 // pred_check
      _
    $region43: #{rnn_cell_forward.1} parent=1 // pred_check_branch
      %150 = sbr.rel (0) target = $region45
    $region44: #{rnn_cell_forward.1} parent=1 // pred_region
      %152 = dma.done [#allocation4], 16
    $region45: #{rnn_cell_forward.1} parent=1 // pred_fallthru
      _
    %153 = vsyncpa [#allocation3], 1
    %154 = vsyncpa [#allocation6], 1
    %155 = vsyncpa [#allocation9], 1
    %156 = vsyncpa [#allocation4], 1

</llo_original>
